<compile_context>
chip_gen: v7x
topology: tpu7x:2x2x1
jax: 0.10.0
libtpu: 0.0.40
codegen_flags: <defaults>
</compile_context>

<pallas_src>
import jax
import jax.numpy as jnp
from jax.experimental import pallas as pl
from jax.experimental.pallas import tpu as pltpu


def _round_up(x, m):
    return ((x + m - 1) // m) * m


def _vmem_capacity_bytes():
    try:
        return int(pltpu.get_tpu_info().vmem_capacity_bytes)
    except Exception:
        return 64 * 1024 * 1024  # conservative fallback: v7x per-TC VMEM


def _kldiv_kernel(invT_ref, n_ref, logits_ref, targets_ref, o_ref):
    inv_T = invT_ref[0]          # f32 scalar from SMEM (no recompile per T)
    n_valid = n_ref[0]           # true batch size (for remainder masking)

    x = logits_ref[...].astype(jnp.float32) * inv_T
    t = targets_ref[...].astype(jnp.float32) * inv_T

    # log_softmax(logits * inv_T) along the class (lane) axis.
    x_max = jnp.max(x, axis=1, keepdims=True)
    x_sh = x - x_max
    x_lse = jnp.log(jnp.sum(jnp.exp(x_sh), axis=1, keepdims=True))   # (tb, 1)

    # softmax(targets * inv_T) pieces (no per-element divide / log of p).
    t_max = jnp.max(t, axis=1, keepdims=True)
    t_sh = t - t_max
    # TODO(synk): if xprof ever shows the EUP slot co-binding on v7x, compute
    # the two per-element exps in bf16 and accumulate in f32 (keep f32 on v5e).
    t_exp = jnp.exp(t_sh)
    t_sum = jnp.sum(t_exp, axis=1, keepdims=True)                    # (tb, 1)

    # sum_c p * (log p - q)
    #   = (1/t_sum) * sum_c t_exp * (t_sh - x_sh + x_lse) - log(t_sum)
    # (uses sum_c p == 1; t_exp underflow -> 0 contribution, xlogy-style.)
    weighted = jnp.sum(t_exp * (t_sh - x_sh + x_lse), axis=1, keepdims=True)
    row_kl = weighted / t_sum - jnp.log(t_sum)                       # (tb, 1)

    # Mask out-of-bounds rows of the remainder tile with a select, so any
    # garbage / NaN in undefined rows cannot propagate into the tile sum.
    tb = logits_ref.shape[0]
    row_ids = (pl.program_id(0) * tb
               + jax.lax.broadcasted_iota(jnp.int32, row_kl.shape, 0))
    row_kl = jnp.where(row_ids < n_valid, row_kl, 0.0)

    tile_sum = jnp.sum(row_kl)                                       # scalar
    # Lane-dense per-tile partial; wrapper reads partials[:, 0, 0].
    o_ref[...] = jnp.full(o_ref.shape, tile_sum, dtype=o_ref.dtype)


def kldiv_pallas(logits, targets, T=1.0, reduction='batchmean', tb=None):
    """KL divergence matching the PyTorch KLDiv module (scalar reductions)."""
    assert logits.shape == targets.shape and logits.ndim == 2
    N, C = logits.shape
    itemsize = jnp.dtype(logits.dtype).itemsize
    # Sublane alignment: 8 rows for 32-bit inputs, 16 for bf16, 32 for 8-bit.
    sub = max(8, 32 // itemsize)

    vmem_cap = _vmem_capacity_bytes()

    if tb is None:
        # HBM step target: ~4 MiB of *input-dtype* bytes per input per grid
        # step (dtype-aware so bf16/fp8 inputs still amortize the ~0.35us
        # per-step overhead).  Good across v5e/v6e/v7x rooflines.
        tgt_rows = max(1, (4 * 1024 * 1024) // (C * itemsize))
        # VMEM bound: 2 inputs x 2 pipeline buffers (input dtype) plus ~4 live
        # f32 temporaries per tile must fit in ~half of physical VMEM.
        bytes_per_row = C * (4 * itemsize + 4 * 4)
        vmem_rows = max(1, (vmem_cap // 2) // bytes_per_row)
        tb = min(tgt_rows, vmem_rows)
        # TODO(synk): for huge vocabularies (C so large that even an (8, C)
        # f32 block cannot fit VMEM), add a second ("arbitrary") grid axis
        # over C with an online max/logsumexp accumulator instead of
        # shrinking tb.
    tb = max(sub, (tb // sub) * sub)
    # Guarantee >= 2 grid steps when N allows it, so the "parallel" batch axis
    # shards across both TensorCores on v7x (no effect on single-TC v5e/v6e).
    tb = min(tb, _round_up(-(-N // 2), sub), _round_up(N, sub))
    tb = max(tb, sub)

    num_tiles = -(-N // tb)

    # Scoped-VMEM limit: generous multiple of the expected footprint, capped
    # at 75% of physical VMEM (keeps v7x <= ~48 MiB, raises v5e's 16 MiB
    # default so double-buffering fits).
    footprint = tb * C * (4 * itemsize + 4 * 4) + (2 << 20)
    vmem_limit = int(min(vmem_cap * 3 // 4, max(32 << 20, 2 * footprint)))
    vmem_limit = max(vmem_limit, footprint)

    inv_t = jnp.asarray([1.0 / float(T)], dtype=jnp.float32)
    n_rows = jnp.asarray([N], dtype=jnp.int32)

    partials = pl.pallas_call(
        _kldiv_kernel,
        out_shape=jax.ShapeDtypeStruct((num_tiles, 8, 128), jnp.float32),
        grid_spec=pltpu.PrefetchScalarGridSpec(
            num_scalar_prefetch=2,
            grid=(num_tiles,),
            in_specs=[
                pl.BlockSpec((tb, C), lambda i, invT, n: (i, 0)),
                pl.BlockSpec((tb, C), lambda i, invT, n: (i, 0)),
            ],
            out_specs=pl.BlockSpec((1, 8, 128), lambda i, invT, n: (i, 0, 0)),
        ),
        compiler_params=pltpu.CompilerParams(
            dimension_semantics=("parallel",),
            vmem_limit_bytes=vmem_limit,
        ),
    )(inv_t, n_rows, logits, targets)

    # Tiny cross-tile reduction + T^2 scaling in plain JAX.
    total = jnp.sum(partials[:, 0, 0])
    scale = float(T) * float(T)
    if reduction == 'batchmean':
        return total * (scale / N)
    if reduction == 'sum':
        return total * scale
    if reduction == 'mean':
        return total * (scale / (N * C))
    # TODO(synk): reduction='none' (per-element output tensor) not implemented.
    raise NotImplementedError(f"reduction={reduction!r} not supported")


def kldiv_reference(logits, targets, T=1.0):
    x = logits.astype(jnp.float32) / T
    t = targets.astype(jnp.float32) / T
    q = jax.nn.log_softmax(x, axis=1)
    p = jax.nn.softmax(t, axis=1)
    log_p = jax.nn.log_softmax(t, axis=1)
    return jnp.sum(p * (log_p - q)) / logits.shape[0] * (T * T)


if __name__ == "__main__":
    key = jax.random.PRNGKey(0)
    k1, k2 = jax.random.split(key)
    # Odd N (not a multiple of the 8-row tile) exercises the in-kernel
    # remainder masking that replaced the old jnp.pad path.
    N, C = 13, 32
    T = 2.0
    logits = jax.random.normal(k1, (N, C), dtype=jnp.float32)
    targets = jax.random.normal(k2, (N, C), dtype=jnp.float32)

    out = kldiv_pallas(logits, targets, T=T)
    out = jax.block_until_ready(out)

    ref = kldiv_reference(logits, targets, T=T)
    assert jnp.allclose(out, ref, rtol=1e-5, atol=1e-5), (out, ref)
    print("KERNEL_OK")
</pallas_src>

<mosaic_0001>
module attributes {stable_mosaic.version = 11 : i64} {
  func.func @_kldiv_kernel(%arg0: i32, %arg1: memref<1xf32, #tpu.memory_space<smem>>, %arg2: memref<1xi32, #tpu.memory_space<smem>>, %arg3: memref<8x32xf32, #tpu.memory_space<vmem>>, %arg4: memref<8x32xf32, #tpu.memory_space<vmem>>, %arg5: memref<1x8x128xf32, #tpu.memory_space<vmem>>) attributes {dimension_semantics = [#tpu.dimension_semantics<parallel>], iteration_bounds = array<i64: 2>, scalar_prefetch = 2 : i64, scratch_operands = 0 : i64, tpu.core_type = #tpu.core_type<tc>, window_params = [{transform_indices = @transform_0, window_bounds = array<i64: 8, 32>}, {transform_indices = @transform_1, window_bounds = array<i64: 8, 32>}, {transform_indices = @transform_2, window_bounds = array<i64: 1, 8, 128>}]} {
    %c0 = arith.constant 0 : index
    %0 = memref.load %arg1[%c0] : memref<1xf32, #tpu.memory_space<smem>>
    %c0_0 = arith.constant 0 : index
    %1 = memref.load %arg2[%c0_0] : memref<1xi32, #tpu.memory_space<smem>>
    %c0_1 = arith.constant 0 : index
    %c0_2 = arith.constant 0 : index
    %2 = vector.load %arg3[%c0_1, %c0_2] : memref<8x32xf32, #tpu.memory_space<vmem>>, vector<8x32xf32>
    %3 = vector.broadcast %0 : f32 to vector<8x32xf32>
    %4 = arith.mulf %2, %3 : vector<8x32xf32>
    %c0_3 = arith.constant 0 : index
    %c0_4 = arith.constant 0 : index
    %5 = vector.load %arg4[%c0_3, %c0_4] : memref<8x32xf32, #tpu.memory_space<vmem>>, vector<8x32xf32>
    %6 = vector.broadcast %0 : f32 to vector<8x32xf32>
    %7 = arith.mulf %5, %6 : vector<8x32xf32>
    %cst = arith.constant dense<0xFF800000> : vector<8xf32>
    %8 = vector.multi_reduction <maximumf>, %4, %cst [1] : vector<8x32xf32> to vector<8xf32>
    %9 = vector.shape_cast %8 : vector<8xf32> to vector<8x1xf32>
    %10 = vector.broadcast %9 : vector<8x1xf32> to vector<8x32xf32>
    %11 = arith.subf %4, %10 : vector<8x32xf32>
    %12 = math.exp %11 : vector<8x32xf32>
    %cst_5 = arith.constant dense<0.000000e+00> : vector<8xf32>
    %13 = vector.multi_reduction <add>, %12, %cst_5 [1] : vector<8x32xf32> to vector<8xf32>
    %14 = vector.shape_cast %13 : vector<8xf32> to vector<8x1xf32>
    %15 = math.log %14 : vector<8x1xf32>
    %cst_6 = arith.constant dense<0xFF800000> : vector<8xf32>
    %16 = vector.multi_reduction <maximumf>, %7, %cst_6 [1] : vector<8x32xf32> to vector<8xf32>
    %17 = vector.shape_cast %16 : vector<8xf32> to vector<8x1xf32>
    %18 = vector.broadcast %17 : vector<8x1xf32> to vector<8x32xf32>
    %19 = arith.subf %7, %18 : vector<8x32xf32>
    %20 = math.exp %19 : vector<8x32xf32>
    %cst_7 = arith.constant dense<0.000000e+00> : vector<8xf32>
    %21 = vector.multi_reduction <add>, %20, %cst_7 [1] : vector<8x32xf32> to vector<8xf32>
    %22 = vector.shape_cast %21 : vector<8xf32> to vector<8x1xf32>
    %23 = arith.subf %19, %11 : vector<8x32xf32>
    %24 = vector.broadcast %15 : vector<8x1xf32> to vector<8x32xf32>
    %25 = arith.addf %23, %24 : vector<8x32xf32>
    %26 = arith.mulf %20, %25 : vector<8x32xf32>
    %cst_8 = arith.constant dense<0.000000e+00> : vector<8xf32>
    %27 = vector.multi_reduction <add>, %26, %cst_8 [1] : vector<8x32xf32> to vector<8xf32>
    %28 = vector.shape_cast %27 : vector<8xf32> to vector<8x1xf32>
    %29 = arith.divf %28, %22 : vector<8x1xf32>
    %30 = math.log %22 : vector<8x1xf32>
    %31 = arith.subf %29, %30 : vector<8x1xf32>
    %c8_i32 = arith.constant 8 : i32
    %32 = arith.muli %arg0, %c8_i32 : i32
    %33 = tpu.iota {dimensions = array<i32: 0>} : vector<8x1xi32>
    %34 = vector.broadcast %32 : i32 to vector<8x1xi32>
    %35 = arith.addi %34, %33 : vector<8x1xi32>
    %36 = vector.broadcast %1 : i32 to vector<8x1xi32>
    %37 = arith.cmpi slt, %35, %36 : vector<8x1xi32>
    %cst_9 = arith.constant 0.000000e+00 : f32
    %38 = vector.broadcast %cst_9 : f32 to vector<8x1xf32>
    %39 = arith.select %37, %31, %38 : vector<8x1xi1>, vector<8x1xf32>
    %40 = vector.shape_cast %39 : vector<8x1xf32> to vector<1x8x1xf32>
    %cst_10 = arith.constant dense<0.000000e+00> : vector<1xf32>
    %41 = vector.multi_reduction <add>, %40, %cst_10 [1, 2] : vector<1x8x1xf32> to vector<1xf32>
    %42 = vector.shape_cast %41 : vector<1xf32> to vector<1x1x1xf32>
    %43 = vector.extract %42[0, 0, 0] : f32 from vector<1x1x1xf32>
    %44 = vector.broadcast %43 : f32 to vector<1x8x128xf32>
    %c0_11 = arith.constant 0 : index
    %c0_12 = arith.constant 0 : index
    %c0_13 = arith.constant 0 : index
    %45 = vector.load %arg5[%c0_11, %c0_12, %c0_13] : memref<1x8x128xf32, #tpu.memory_space<vmem>>, vector<1x8x128xf32>
    tpu.vector_store %arg5[%c0_11, %c0_12, %c0_13], %44 {strides = array<i32>} : memref<1x8x128xf32, #tpu.memory_space<vmem>>, vector<1x8x128xf32>,
    return
  }
  func.func @transform_0(%arg0: i32, %arg1: memref<1xf32, #tpu.memory_space<smem>>, %arg2: memref<1xi32, #tpu.memory_space<smem>>) -> (i32, i32) {
    %c0_i32 = arith.constant 0 : i32
    %c0_i32_0 = arith.constant 0 : i32
    return %arg0, %c0_i32 : i32, i32
  }
  func.func @transform_1(%arg0: i32, %arg1: memref<1xf32, #tpu.memory_space<smem>>, %arg2: memref<1xi32, #tpu.memory_space<smem>>) -> (i32, i32) {
    %c0_i32 = arith.constant 0 : i32
    %c0_i32_0 = arith.constant 0 : i32
    return %arg0, %c0_i32 : i32, i32
  }
  func.func @transform_2(%arg0: i32, %arg1: memref<1xf32, #tpu.memory_space<smem>>, %arg2: memref<1xi32, #tpu.memory_space<smem>>) -> (i32, i32, i32) {
    %c0_i32 = arith.constant 0 : i32
    %c0_i32_0 = arith.constant 0 : i32
    %c0_i32_1 = arith.constant 0 : i32
    return %arg0, %c0_i32, %c0_i32_0 : i32, i32, i32
  }
}

</mosaic_0001>

<llo_original>
// kernel: tpu_custom_call.1
$region0: #{tpu_custom_call.1}
  #allocation0 [shape = 'u32[]', space=smem, size = 0x4, offset = 0x4, fixed_abs, tag = 'smem constant byte address 0x4 - core index']
  #allocation1 [shape = 'u32[144,128]{1,0:T(1,128)}', space=vmem, size = 0x12000, scoped, tag = 'internal scratch']
  #allocation2 [shape = 's32[1]{0}', space=sflag, size = 0x4, scoped, tag = 'scoped memory for tpu_custom_call.1']
  #allocation3 [shape = 'f32[1]{0:T(128)S(6)}', space=smem, size = 0x200, scoped, tag = 'prefetched SMEM operand 0']
  #allocation4 [shape = 's32[1]{0:T(128)S(6)}', space=smem, size = 0x200, scoped, tag = 'prefetched SMEM operand 1']
  %s0 = inlined_call_operand.<no memory space> [shape: f32[1], index: 0, kind: input, shape index: {}]
  %s1 = inlined_call_operand.<no memory space> [shape: s32[1], index: 1, kind: input, shape index: {}]
  %s2 = inlined_call_operand.hbm [shape: f32[13,32], index: 2, kind: input, shape index: {}]
  %s3 = inlined_call_operand.hbm [shape: f32[13,32], index: 3, kind: input, shape index: {}]
  %s4 = inlined_call_operand.hbm [shape: f32[2,8,128], index: 4, kind: output, shape index: {}]
  %s5 = sld [smem:[#allocation0]]
  $region49: #{tpu_custom_call.1} parent=0
    _
  %s7 = ssub.s32 1, %s5
  %s8 = scalar_select 0, %s7, %s5
  %9 = sst [smem:[#allocation3]] %s0
  %10 = sst [smem:[#allocation4]] %s1
  $region1: #{tpu_custom_call.1} parent=0
    #allocation5 [shape = 'u8[8192]{0}', space=vmem, size = 0x2000, scoped, tag = 'input window, operand 2']
    #allocation6 [shape = 's32[2]{0}', space=sflag, size = 0x8, scoped, tag = 'scoped memory for tpu_custom_call.1']
    #allocation7 [shape = 's32[2]{0}', space=sflag, size = 0x8, scoped, tag = 'scoped memory for tpu_custom_call.1']
    #allocation8 [shape = 'u8[8192]{0}', space=vmem, size = 0x2000, scoped, tag = 'input window, operand 3']
    #allocation9 [shape = 's32[2]{0}', space=sflag, size = 0x8, scoped, tag = 'scoped memory for tpu_custom_call.1']
    #allocation10 [shape = 'u8[8192]{0}', space=vmem, size = 0x2000, scoped, tag = 'output window, operand 0']
    %11 = vsyncpa [#allocation6], 0
    %s12 = scalar_lea.sflag [#allocation6], 1
    %13 = vsyncpa %s12, 0
    %14 = vsyncpa [#allocation9], 0
    %s15 = scalar_lea.sflag [#allocation9], 1
    %16 = vsyncpa %s15, 0
    %17 = vsyncpa [#allocation7], 0
    %s18 = scalar_lea.sflag [#allocation7], 1
    %19 = vsyncpa %s18, 0
    loop: start=0, step=1, limit=4
    $region2: #{tpu_custom_call.1} parent=1 // loop_pre_header
      _
    $region3: #{tpu_custom_call.1} parent=1 // loop_header
      %s21 = sphi 0, %s25
      %p22 = scmp.ge.s32.totalorder %s21, 4
      %s31 = sphi 0, %s33
      %s34 = sphi 0, %s31
      %s35 = sphi 0, %s34
      %s51 = sphi 0, %s35
      %s57 = sphi 0, %s59
      %s60 = sphi 0, %s57
      %s61 = sphi 0, %s60
      %s77 = sphi 0, %s61
      %s83 = sphi 0, %s85
      %s86 = sphi 0, %s83
      %s87 = sphi 0, %s86
      %s103 = sphi 0, %s87
    $region4: #{tpu_custom_call.1} parent=1 // loop_header_branch
      %24 = sbr.rel (%p22) target = $region8
    $region5: #{tpu_custom_call.1} parent=1 // loop_body
      %s26 = ssub.s32 %s21, 1
      %s27 = ssub.s32 %s21, 2
      %s28 = sadd.s32 %s21, 1
      %s29 = ssub.s32 %s21, %s28
      %p30 = scmp.eq.s32.totalorder %s29, 0
      %s32 = sadd.s32 %s31, 1
      %s33 = scalar_select %p30, %s31, %s32
      %p36 = pneg %p30
      %p37 = scmp.eq.s32.totalorder %s21, 1
      %p38 = por %p36, %p37
      %p39 = scmp.ne.s32.totalorder %s31, %s34
      %p40 = scmp.eq.s32.totalorder %s21, 0
      %p41 = por %p39, %p40
      %p42 = scmp.ne.s32.totalorder %s31, %s34
      %p43 = scmp.eq.s32.totalorder %s26, 1
      %p44 = por %p42, %p43
      %p45 = scmp.ne.s32.totalorder %s34, %s35
      %p46 = scmp.eq.s32.totalorder %s26, 0
      %p47 = por %p45, %p46
      %p48 = scmp.ne.s32.totalorder %s34, %s35
      %p49 = scmp.eq.s32.totalorder %s27, 1
      %p50 = por %p48, %p49
      %p52 = scmp.ne.s32.totalorder %s35, %s51
      %p53 = scmp.eq.s32.totalorder %s27, 0
      %p54 = por %p52, %p53
      %s55 = ssub.s32 %s21, %s28
      %p56 = scmp.eq.s32.totalorder %s55, 0
      %s58 = sadd.s32 %s57, 1
      %s59 = scalar_select %p56, %s57, %s58
      %p62 = pneg %p56
      %p63 = scmp.eq.s32.totalorder %s21, 1
      %p64 = por %p62, %p63
      %p65 = scmp.ne.s32.totalorder %s57, %s60
      %p66 = scmp.eq.s32.totalorder %s21, 0
      %p67 = por %p65, %p66
      %p68 = scmp.ne.s32.totalorder %s57, %s60
      %p69 = scmp.eq.s32.totalorder %s26, 1
      %p70 = por %p68, %p69
      %p71 = scmp.ne.s32.totalorder %s60, %s61
      %p72 = scmp.eq.s32.totalorder %s26, 0
      %p73 = por %p71, %p72
      %p74 = scmp.ne.s32.totalorder %s60, %s61
      %p75 = scmp.eq.s32.totalorder %s27, 1
      %p76 = por %p74, %p75
      %p78 = scmp.ne.s32.totalorder %s61, %s77
      %p79 = scmp.eq.s32.totalorder %s27, 0
      %p80 = por %p78, %p79
      %s81 = ssub.s32 %s21, %s28
      %p82 = scmp.eq.s32.totalorder %s81, 0
      %s84 = sadd.s32 %s83, 1
      %s85 = scalar_select %p82, %s83, %s84
      %p88 = pneg %p82
      %p89 = scmp.eq.s32.totalorder %s21, 1
      %p90 = por %p88, %p89
      %p91 = scmp.ne.s32.totalorder %s83, %s86
      %p92 = scmp.eq.s32.totalorder %s21, 0
      %p93 = por %p91, %p92
      %p94 = scmp.ne.s32.totalorder %s83, %s86
      %p95 = scmp.eq.s32.totalorder %s26, 1
      %p96 = por %p94, %p95
      %p97 = scmp.ne.s32.totalorder %s86, %s87
      %p98 = scmp.eq.s32.totalorder %s26, 0
      %p99 = por %p97, %p98
      %p100 = scmp.ne.s32.totalorder %s86, %s87
      %p101 = scmp.eq.s32.totalorder %s27, 1
      %p102 = por %p100, %p101
      %p104 = scmp.ne.s32.totalorder %s87, %s103
      %p105 = scmp.eq.s32.totalorder %s27, 0
      %p106 = por %p104, %p105
      %p107 = scmp.le.s32.totalorder 1, %s21
      %p108 = scmp.lt.s32.totalorder %s21, 3
      %p109 = pnand %p107, %p108
      %p110 = pneg %p109
      // Predicated region
      $region9: #{tpu_custom_call.1} parent=5 // pred_check
        _
      $region10: #{tpu_custom_call.1} parent=5 // pred_check_branch
        %112 = sbr.rel (%p109) target = $region12
      $region11: #{tpu_custom_call.1} parent=5 // pred_region
        %s113 = ssub.s32 %s21, 1
      $region12: #{tpu_custom_call.1} parent=5 // pred_fallthru
        _
      %p114 = scmp.lt.s32.totalorder %s21, 2
      // Predicated region
      $region13: #{tpu_custom_call.1} parent=5 // pred_check
        %p115 = pneg %p114
      $region14: #{tpu_custom_call.1} parent=5 // pred_check_branch
        %117 = sbr.rel (%p115) target = $region16
      $region15: #{tpu_custom_call.1} parent=5 // pred_region
        // Predicated region
        $region17: #{tpu_custom_call.1} parent=15 // pred_check
          %p118 = pneg %p41
        $region18: #{tpu_custom_call.1} parent=15 // pred_check_branch
          %120 = sbr.rel (%p118) target = $region20
        $region19: #{tpu_custom_call.1} parent=15 // pred_region
          %s121 = sand.u32 %s31, 1
          %s122 = scalar_lea.sflag [#allocation6], %s121
          %s123 = sand.u32 %s31, 1
          %s124 = smul.addr %s123, 8
          %s125 = scalar_lea.vmem [#allocation5], %s124
          %s127 = ssub.s32 128, 128
          %128 = vsyncadd %s122, %s127
          %s129 = smul.addr %s21, 128
          %s130 = scalar_lea.hbm %s2, %s129
          %s132 = sshll.u32 %s125, 4
          %s133 = int_to_ptr.vmem [resolvable:$true] %s132
          %135 = dma.hbm_to_vmem [thread:$0]  %s130, 128, %s133, %s122
        $region20: #{tpu_custom_call.1} parent=15 // pred_fallthru
          _
        // Predicated region
        $region21: #{tpu_custom_call.1} parent=15 // pred_check
          %p136 = pneg %p67
        $region22: #{tpu_custom_call.1} parent=15 // pred_check_branch
          %138 = sbr.rel (%p136) target = $region24
        $region23: #{tpu_custom_call.1} parent=15 // pred_region
          %s139 = sand.u32 %s57, 1
          %s140 = scalar_lea.sflag [#allocation9], %s139
          %s141 = sand.u32 %s57, 1
          %s142 = smul.addr %s141, 8
          %s143 = scalar_lea.vmem [#allocation8], %s142
          %s145 = ssub.s32 128, 128
          %146 = vsyncadd %s140, %s145
          %s147 = smul.addr %s21, 128
          %s148 = scalar_lea.hbm %s3, %s147
          %s150 = sshll.u32 %s143, 4
          %s151 = int_to_ptr.vmem [resolvable:$true] %s150
          %153 = dma.hbm_to_vmem [thread:$0]  %s148, 128, %s151, %s140
        $region24: #{tpu_custom_call.1} parent=15 // pred_fallthru
          _
      $region16: #{tpu_custom_call.1} parent=5 // pred_fallthru
        _
      %p154 = scmp.le.s32.totalorder 1, %s21
      %p155 = scmp.lt.s32.totalorder %s21, 3
      %p156 = pnand %p154, %p155
      %p157 = pneg %p156
      // Predicated region
      $region25: #{tpu_custom_call.1} parent=5 // pred_check
        _
      $region26: #{tpu_custom_call.1} parent=5 // pred_check_branch
        %159 = sbr.rel (%p156) target = $region28
      $region27: #{tpu_custom_call.1} parent=5 // pred_region
        %s160 = ssub.s32 %s21, 1
        %s161 = sand.u32 %s34, 1
        %s162 = scalar_lea.sflag [#allocation6], %s161
        %s163 = sand.u32 %s34, 1
        %s164 = smul.addr %s163, 8
        %s165 = scalar_lea.vmem [#allocation5], %s164
        // Predicated region
        $region29: #{tpu_custom_call.1} parent=27 // pred_check
          %p166 = pneg %p47
        $region30: #{tpu_custom_call.1} parent=27 // pred_check_branch
          %168 = sbr.rel (%p166) target = $region32
        $region31: #{tpu_custom_call.1} parent=27 // pred_region
          %169 = dma.done %s162, 128
        $region32: #{tpu_custom_call.1} parent=27 // pred_fallthru
          _
        %s170 = sand.u32 %s60, 1
        %s171 = scalar_lea.sflag [#allocation9], %s170
        %s172 = sand.u32 %s60, 1
        %s173 = smul.addr %s172, 8
        %s174 = scalar_lea.vmem [#allocation8], %s173
        // Predicated region
        $region33: #{tpu_custom_call.1} parent=27 // pred_check
          %p175 = pneg %p73
        $region34: #{tpu_custom_call.1} parent=27 // pred_check_branch
          %177 = sbr.rel (%p175) target = $region36
        $region35: #{tpu_custom_call.1} parent=27 // pred_region
          %178 = dma.done %s171, 128
        $region36: #{tpu_custom_call.1} parent=27 // pred_fallthru
          _
        %s179 = sand.u32 %s34, 1
        %s180 = scalar_lea.sflag [#allocation6], %s179
        %s181 = sand.u32 %s34, 1
        %s182 = smul.addr %s181, 8
        %s183 = scalar_lea.vmem [#allocation5], %s182
        %p184 = pneg %p47
        %p185 = pneg %p44
        %s186 = sand.u32 %s60, 1
        %s187 = scalar_lea.sflag [#allocation9], %s186
        %s188 = sand.u32 %s60, 1
        %s189 = smul.addr %s188, 8
        %s190 = scalar_lea.vmem [#allocation8], %s189
        %p191 = pneg %p73
        %p192 = pneg %p70
        %p193 = pneg %p99
        %p194 = pneg %p96
        %s195 = sand.u32 %s86, 1
        %s196 = scalar_lea.sflag [#allocation7], %s195
        %s197 = sand.u32 %s86, 1
        %s198 = smul.addr %s197, 8
        %s199 = scalar_lea.vmem [#allocation10], %s198
        %s200 = sld [smem:[#allocation3]]
        %s201 = sld [smem:[#allocation4]]
        %v202 = vld [vmem:[%s165] sm:$0xff]
        %v203 = vstv %s200
        %v204 = vmul.f32 %v202, %v203
        %v205 = vld [vmem:[%s174] sm:$0xff]
        %v206 = vmul.f32 %v205, %v203
        %vm207 = vcmask 261120
        %v208 = vsel %vm207, %v204, -inf
        %209 = vmax.xlane.f32.xlu0 %v208
        %v210 = vpop.xlane.xlu0 %209
        %v211 = vsub.f32 %v204, %v210
        %v212 = vmul.f32 %v211, 1.442695
        %v213 = vpow.pop %v212
        %v214 = vsel %vm207, %v213, 0.0
        %215 = vadd.xlane.f32.xlu0 %v214
        %v216 = vpop.xlane.xlu0 %215
        %v217 = vlog2.pop %v216
        %v218 = vmul.f32 %v217, 0.6931472
        %v219 = vsel %vm207, %v206, -inf
        %220 = vmax.xlane.f32.xlu0 %v219
        %v221 = vpop.xlane.xlu0 %220
        %v222 = vsub.f32 %v206, %v221
        %v223 = vmul.f32 %v222, 1.442695
        %v224 = vpow.pop %v223
        %v225 = vsel %vm207, %v224, 0.0
        %226 = vadd.xlane.f32.xlu0 %v225
        %v227 = vpop.xlane.xlu0 %226
        %v228 = vsub.f32 %v222, %v211
        %v229 = vadd.f32 %v228, %v218
        %v230 = vmul.f32 %v224, %v229
        %v231 = vsel %vm207, %v230, 0.0
        %232 = vadd.xlane.f32.xlu0 %v231
        %v233 = vpop.xlane.xlu0 %232
        %v234 = vrcp.pop %v227
        %v235 = vmul.f32 %v233, %v234
        %v236 = vlog2.pop %v227
        %v237 = vmul.f32 %v236, 0.6931472
        %v238 = vsub.f32 %v235, %v237
        %s239 = smul.u32 %s26, 8
        %v240 = vlaneseq
        %v241 = vshrl.u32 %v240, 7
        %v242 = vstv %s239
        %v243 = vadd.s32 %v242, %v241
        %v244 = vstv %s201
        %vm245 = vcmp.lt.s32.totalorder %v243, %v244
        %v246 = vsel %vm245, %v238, 0.0
        %vm247 = vcmask 7168
        %v248 = vsel %vm247, %v246, 0.0
        %249 = vadd.xlane.f32.xlu0 %v248
        %v250 = vpop.xlane.xlu0 %249
        %v251 = vrot.slane %v250, 4
        %v252 = vadd.f32 %v250, %v251
        %v253 = vrot.slane %v252, 2
        %v254 = vadd.f32 %v252, %v253
        %v255 = vrot.slane %v254, 1
        %v256 = vadd.f32 %v254, %v255
        %s257 = vtos %v256
        %v258 = vstv %s257
        %259 = vst [vmem:[%s199] sm:$0xff] %v258
        %s260 = sand.u32 %s86, 1
        %s261 = scalar_lea.sflag [#allocation7], %s260
        %s262 = sand.u32 %s86, 1
        %s263 = smul.addr %s262, 8
        %s264 = scalar_lea.vmem [#allocation10], %s263
        // Predicated region
        $region37: #{tpu_custom_call.1} parent=27 // pred_check
          %p265 = pneg %p96
        $region38: #{tpu_custom_call.1} parent=27 // pred_check_branch
          %267 = sbr.rel (%p265) target = $region40
        $region39: #{tpu_custom_call.1} parent=27 // pred_region
          %s269 = ssub.s32 128, 128
          %270 = vsyncadd %s261, %s269
          %s271 = smul.addr %s26, 128
          %s272 = scalar_lea.hbm %s4, %s271
          %s274 = sshll.u32 %s264, 4
          %s275 = int_to_ptr.vmem [resolvable:$true] %s274
          %277 = dma.vmem_to_hbm [thread:$0]  %s275, 128, %s272, %s261
        $region40: #{tpu_custom_call.1} parent=27 // pred_fallthru
          _
      $region28: #{tpu_custom_call.1} parent=5 // pred_fallthru
        _
      %p278 = scmp.le.s32.totalorder 2, %s21
      // Predicated region
      $region41: #{tpu_custom_call.1} parent=5 // pred_check
        %p279 = pneg %p278
      $region42: #{tpu_custom_call.1} parent=5 // pred_check_branch
        %281 = sbr.rel (%p279) target = $region44
      $region43: #{tpu_custom_call.1} parent=5 // pred_region
        %s282 = ssub.s32 %s21, 2
        // Predicated region
        $region45: #{tpu_custom_call.1} parent=43 // pred_check
          %p283 = pneg %p102
        $region46: #{tpu_custom_call.1} parent=43 // pred_check_branch
          %285 = sbr.rel (%p283) target = $region48
        $region47: #{tpu_custom_call.1} parent=43 // pred_region
          %s286 = sand.u32 %s87, 1
          %s287 = scalar_lea.sflag [#allocation7], %s286
          %s288 = sand.u32 %s87, 1
          %s289 = smul.addr %s288, 8
          %s290 = scalar_lea.vmem [#allocation10], %s289
          %291 = dma.done %s287, 128
        $region48: #{tpu_custom_call.1} parent=43 // pred_fallthru
          _
      $region44: #{tpu_custom_call.1} parent=5 // pred_fallthru
        _
    $region6: #{tpu_custom_call.1} parent=1 // loop_footer
      %s25 = sadd.s32 1, %s21
    $region7: #{tpu_custom_call.1} parent=1 // loop_footer_branch
      %20 = sbr.rel target = $region3
    $region8: #{tpu_custom_call.1} parent=1 // loop_exit
      _
    %292 = vsyncpa [#allocation6], 1
    %s293 = scalar_lea.sflag [#allocation6], 1
    %294 = vsyncpa %s293, 1
    %295 = vsyncpa [#allocation9], 1
    %s296 = scalar_lea.sflag [#allocation9], 1
    %297 = vsyncpa %s296, 1
    %298 = vsyncpa [#allocation7], 1
    %s299 = scalar_lea.sflag [#allocation7], 1
    %300 = vsyncpa %s299, 1

</llo_original>
